<compile_context>
chip_gen: v7x
topology: tpu7x:2x2x1
jax: 0.10.0
libtpu: 0.0.40
codegen_flags: <defaults>
</compile_context>

<pallas_src>
import jax
import jax.numpy as jnp
from jax.experimental import pallas as pl
from jax.experimental.pallas import tpu as pltpu


def _mish_kernel(x_ref, o_ref):
    x = x_ref[...].astype(jnp.float32)
    # u = exp(softplus(x)) = 1 + exp(x); clamp the exp argument so the
    # non-selected branch of the where never produces inf/nan.
    u = 1.0 + jnp.exp(jnp.minimum(x, 20.0))
    u2 = u * u
    # tanh(softplus(x)) = (u^2 - 1) / (u^2 + 1); single exp + single reciprocal
    # (both on the EUP slot) instead of exp + log1p + tanh.
    t = (u2 - 1.0) * pl.reciprocal(u2 + 1.0, approx=False)
    # PyTorch softplus threshold: for x > 20, softplus(x) = x and tanh(x) == 1
    # in f32, so mish(x) == x.
    y = jnp.where(x > 20.0, x, x * t)
    o_ref[...] = y.astype(o_ref.dtype)


def mish(x: jax.Array, *, block_bytes: int = 2 * 1024 * 1024) -> jax.Array:
    """Elementwise Mish: x * tanh(softplus(x)). Works for any shape."""
    orig_shape = x.shape
    orig_dtype = x.dtype
    n = x.size
    if n == 0:
        return x

    flat = x.reshape(-1)

    # Pad only up to a multiple of 128 (needed for the lane-dense 2D view).
    # This is a no-op for typical NCHW activation sizes.
    n_pad = ((n + 127) // 128) * 128
    padded = n_pad != n
    if padded:
        flat = jnp.pad(flat, (0, n_pad - n))

    # Widest lane dimension (multiple of 128) that divides n_pad: one large
    # contiguous DMA per block and wide, unmasked lane-dense stores.
    W = 128
    for cand in (4096, 2048, 1024, 512, 256):
        if n_pad % cand == 0:
            W = cand
            break
    rows = n_pad // W

    # Block rows: target ~block_bytes per block (sized so 2x double-buffered
    # in+out stays well under every generation's scoped-VMEM default, incl.
    # v7x's 64 MiB physical VMEM). Multiple of 16 covers bf16 sublane packing.
    elem_bytes = jnp.dtype(orig_dtype).itemsize
    target_rows = max((block_bytes // (W * elem_bytes)) // 16 * 16, 16)
    if rows <= target_rows:
        tile_rows = rows                      # single block == full array dims
        grid = (1,)
    else:
        tile_rows = target_rows               # ragged tail (if any) is masked
        grid = (pl.cdiv(rows, tile_rows),)

    x2d = flat.reshape(rows, W)

    out2d = pl.pallas_call(
        _mish_kernel,
        out_shape=jax.ShapeDtypeStruct((rows, W), orig_dtype),
        grid_spec=pltpu.PrefetchScalarGridSpec(
            num_scalar_prefetch=0,
            grid=grid,
            in_specs=[pl.BlockSpec((tile_rows, W), lambda i: (i, 0))],
            out_specs=pl.BlockSpec((tile_rows, W), lambda i: (i, 0)),
        ),
        compiler_params=pltpu.CompilerParams(
            dimension_semantics=("parallel",),
        ),
    )(x2d)

    out_flat = out2d.reshape(-1)
    if padded:
        out_flat = out_flat[:n]
    return out_flat.reshape(orig_shape)


def _mish_ref(x):
    # Pure-JAX reference matching PyTorch: x * tanh(softplus(x)),
    # softplus thresholded at 20.
    xf = x.astype(jnp.float32)
    sp = jnp.where(xf > 20.0, xf, jnp.log1p(jnp.exp(jnp.minimum(xf, 20.0))))
    return (xf * jnp.tanh(sp)).astype(x.dtype)


if __name__ == "__main__":
    key = jax.random.PRNGKey(0)

    # NCHW activations, small shapes: batch=2, channels=4, spatial=16.
    x = jax.random.normal(key, (2, 4, 16, 16), dtype=jnp.float32) * 3.0
    y = mish(x)
    jax.block_until_ready(y)
    y_ref = _mish_ref(x)
    assert y.shape == x.shape and y.dtype == x.dtype
    assert jnp.allclose(y, y_ref, atol=1e-5, rtol=1e-5)

    # Ragged size (exercises the pad-to-128 + slice path) plus extreme values
    # (softplus threshold / large-negative saturation).
    x2 = jax.random.normal(jax.random.PRNGKey(1), (3, 5, 7, 11), dtype=jnp.float32) * 8.0
    x2 = x2.at[0, 0, 0, :6].set(jnp.array([-100.0, -30.0, 0.0, 5.0, 25.0, 100.0]))
    y2 = mish(x2)
    jax.block_until_ready(y2)
    assert jnp.allclose(y2, _mish_ref(x2), atol=1e-5, rtol=1e-5)

    # bf16 fast path (halves HBM bytes; compute stays f32 inside the kernel).
    x3 = (jax.random.normal(jax.random.PRNGKey(2), (2, 4, 16, 16)) * 3.0).astype(jnp.bfloat16)
    y3 = mish(x3)
    jax.block_until_ready(y3)
    assert y3.dtype == jnp.bfloat16
    assert jnp.allclose(y3.astype(jnp.float32), _mish_ref(x3).astype(jnp.float32),
                        atol=2e-2, rtol=2e-2)

    print("KERNEL_OK")
</pallas_src>

<mosaic_0001>
module attributes {stable_mosaic.version = 11 : i64} {
  func.func @_mish_kernel(%arg0: i32, %arg1: memref<1x2048xf32, #tpu.memory_space<vmem>>, %arg2: memref<1x2048xf32, #tpu.memory_space<vmem>>) attributes {dimension_semantics = [#tpu.dimension_semantics<parallel>], iteration_bounds = array<i64: 1>, scalar_prefetch = 0 : i64, scratch_operands = 0 : i64, tpu.core_type = #tpu.core_type<tc>, window_params = [{transform_indices = @transform_0, window_bounds = array<i64: 1, 2048>}, {transform_indices = @transform_1, window_bounds = array<i64: 1, 2048>}]} {
    %c0 = arith.constant 0 : index
    %c0_0 = arith.constant 0 : index
    %0 = vector.load %arg1[%c0, %c0_0] : memref<1x2048xf32, #tpu.memory_space<vmem>>, vector<1x2048xf32>
    %cst = arith.constant 2.000000e+01 : f32
    %1 = vector.broadcast %cst : f32 to vector<1x2048xf32>
    %2 = arith.minimumf %0, %1 : vector<1x2048xf32>
    %3 = math.exp %2 : vector<1x2048xf32>
    %cst_1 = arith.constant 1.000000e+00 : f32
    %4 = vector.broadcast %cst_1 : f32 to vector<1x2048xf32>
    %5 = arith.addf %4, %3 : vector<1x2048xf32>
    %6 = arith.mulf %5, %5 : vector<1x2048xf32>
    %cst_2 = arith.constant 1.000000e+00 : f32
    %7 = vector.broadcast %cst_2 : f32 to vector<1x2048xf32>
    %8 = arith.subf %6, %7 : vector<1x2048xf32>
    %cst_3 = arith.constant 1.000000e+00 : f32
    %9 = vector.broadcast %cst_3 : f32 to vector<1x2048xf32>
    %10 = arith.addf %6, %9 : vector<1x2048xf32>
    %11 = tpu.reciprocal %10 : vector<1x2048xf32> -> vector<1x2048xf32>
    %12 = arith.mulf %8, %11 : vector<1x2048xf32>
    %cst_4 = arith.constant 2.000000e+01 : f32
    %13 = vector.broadcast %cst_4 : f32 to vector<1x2048xf32>
    %14 = arith.cmpf ogt, %0, %13 : vector<1x2048xf32>
    %15 = arith.mulf %0, %12 : vector<1x2048xf32>
    %16 = arith.select %14, %0, %15 : vector<1x2048xi1>, vector<1x2048xf32>
    %c0_5 = arith.constant 0 : index
    %c0_6 = arith.constant 0 : index
    %17 = vector.load %arg2[%c0_5, %c0_6] : memref<1x2048xf32, #tpu.memory_space<vmem>>, vector<1x2048xf32>
    tpu.vector_store %arg2[%c0_5, %c0_6], %16 {strides = array<i32>} : memref<1x2048xf32, #tpu.memory_space<vmem>>, vector<1x2048xf32>,
    return
  }
  func.func @transform_0(%arg0: i32) -> (i32, i32) {
    %c0_i32 = arith.constant 0 : i32
    %c0_i32_0 = arith.constant 0 : i32
    return %arg0, %c0_i32 : i32, i32
  }
  func.func @transform_1(%arg0: i32) -> (i32, i32) {
    %c0_i32 = arith.constant 0 : i32
    %c0_i32_0 = arith.constant 0 : i32
    return %arg0, %c0_i32 : i32, i32
  }
}

</mosaic_0001>

<llo_original>
// kernel: tpu_custom_call.1
$region0: #{tpu_custom_call.1}
  #allocation0 [shape = 'u32[]', space=smem, size = 0x4, offset = 0x4, fixed_abs, tag = 'smem constant byte address 0x4 - core index']
  #allocation1 [shape = 'u32[144,128]{1,0:T(1,128)}', space=vmem, size = 0x12000, scoped, tag = 'internal scratch']
  %s0 = inlined_call_operand.hbm [shape: f32[1,2048], index: 0, kind: input, shape index: {}]
  %s1 = inlined_call_operand.hbm [shape: f32[1,2048], index: 1, kind: output, shape index: {}]
  %s2 = sld [smem:[#allocation0]]
  $region18: #{tpu_custom_call.1} parent=0
    _
  %s4 = ssub.s32 1, %s2
  %s5 = scalar_select 0, %s4, %s2
  $region1: #{tpu_custom_call.1} parent=0
    #allocation2 [shape = 'u8[8192]{0}', space=vmem, size = 0x2000, scoped, tag = 'input window, operand 0, single buffered']
    #allocation3 [shape = 's32[1]{0}', space=sflag, size = 0x4, scoped, tag = 'scoped memory for tpu_custom_call.1']
    #allocation4 [shape = 's32[1]{0}', space=sflag, size = 0x4, scoped, tag = 'scoped memory for tpu_custom_call.1']
    #allocation5 [shape = 'u8[8192]{0}', space=vmem, size = 0x2000, scoped, tag = 'output window, operand 0, single buffered']
    %6 = vsyncpa [#allocation3], 0
    %7 = vsyncpa [#allocation4], 0
    // Predicated region
    $region2: #{tpu_custom_call.1} parent=1 // pred_check
      _
    $region3: #{tpu_custom_call.1} parent=1 // pred_check_branch
      %9 = sbr.rel (0) target = $region5
    $region4: #{tpu_custom_call.1} parent=1 // pred_region
      %s11 = ssub.s32 256, 256
      %12 = vsyncadd [#allocation3], %s11
      %s14 = sshll.u32 [#allocation2], 4
      %s15 = int_to_ptr.vmem [resolvable:$true] %s14
      %17 = dma.hbm_to_vmem [thread:$0]  %s0, 256, %s15, [#allocation3]
    $region5: #{tpu_custom_call.1} parent=1 // pred_fallthru
      _
    // Predicated region
    $region6: #{tpu_custom_call.1} parent=1 // pred_check
      _
    $region7: #{tpu_custom_call.1} parent=1 // pred_check_branch
      %19 = sbr.rel (0) target = $region9
    $region8: #{tpu_custom_call.1} parent=1 // pred_region
      %20 = dma.done [#allocation3], 256
    $region9: #{tpu_custom_call.1} parent=1 // pred_fallthru
      _
    %v21 = vld [vmem:[#allocation2] sm:$0xff]
    %v22 = vld [vmem:[#allocation2 + $0x8] sm:$0xff]
    %v23 = vmin.f32 %v21, 20.0
    %v24 = vmin.f32 %v22, 20.0
    %v25 = vmul.f32 %v23, 1.442695
    %v26 = vpow.pop %v25
    %v27 = vmul.f32 %v24, 1.442695
    %v28 = vpow.pop %v27
    %v29 = vadd.f32 %v26, 1.0
    %v30 = vadd.f32 %v28, 1.0
    %v31 = vmul.f32 %v29, %v29
    %v32 = vmul.f32 %v30, %v30
    %v33 = vsub.f32 %v31, 1.0
    %v34 = vsub.f32 %v32, 1.0
    %v35 = vadd.f32 %v31, 1.0
    %v36 = vadd.f32 %v32, 1.0
    %v37 = vrcp.pop %v35
    %v38 = vrcp.pop %v36
    %v39 = vmul.f32 %v33, %v37
    %v40 = vmul.f32 %v34, %v38
    %vm41 = vcmp.gt.f32.partialorder %v21, 20.0
    %vm42 = vcmp.gt.f32.partialorder %v22, 20.0
    %v43 = vmul.f32 %v21, %v39
    %v44 = vmul.f32 %v22, %v40
    %v45 = vsel %vm41, %v21, %v43
    %v46 = vsel %vm42, %v22, %v44
    %47 = vst [vmem:[#allocation5] sm:$0xff] %v45
    %48 = vst [vmem:[#allocation5 + $0x8] sm:$0xff] %v46
    // Predicated region
    $region10: #{tpu_custom_call.1} parent=1 // pred_check
      _
    $region11: #{tpu_custom_call.1} parent=1 // pred_check_branch
      %50 = sbr.rel (0) target = $region13
    $region12: #{tpu_custom_call.1} parent=1 // pred_region
      %s52 = ssub.s32 256, 256
      %53 = vsyncadd [#allocation4], %s52
      %s55 = sshll.u32 [#allocation5], 4
      %s56 = int_to_ptr.vmem [resolvable:$true] %s55
      %58 = dma.vmem_to_hbm [thread:$0]  %s56, 256, %s1, [#allocation4]
    $region13: #{tpu_custom_call.1} parent=1 // pred_fallthru
      _
    // Predicated region
    $region14: #{tpu_custom_call.1} parent=1 // pred_check
      _
    $region15: #{tpu_custom_call.1} parent=1 // pred_check_branch
      %60 = sbr.rel (0) target = $region17
    $region16: #{tpu_custom_call.1} parent=1 // pred_region
      %61 = dma.done [#allocation4], 256
    $region17: #{tpu_custom_call.1} parent=1 // pred_fallthru
      _
    %62 = vsyncpa [#allocation3], 1
    %63 = vsyncpa [#allocation4], 1

</llo_original>
